<compile_context>
chip_gen: v7x
topology: tpu7x:2x2x1
jax: 0.10.0
libtpu: 0.0.40
codegen_flags: <defaults>
</compile_context>

<pallas_src>
import functools

import jax
import jax.numpy as jnp
from jax import lax
from jax.experimental import pallas as pl
from jax.experimental.pallas import tpu as pltpu

_EPS = 1e-8
_MIB = 1024 * 1024
_MXU_REDUCE_MAX_D = 256  # use MXU for the row reductions when D <= this


def _cossim_rows_kernel(x_ref, y_ref, o_ref, *, use_mxu):
    """Per-row (1 - cosine similarity) for one (TB, D) tile -> (TB, 1)."""
    x = x_ref[...].astype(jnp.float32)
    y = y_ref[...].astype(jnp.float32)
    xy = x * y
    xx = x * x
    yy = y * y
    if use_mxu:
        # Small D: land the three lane reductions on the (idle) MXU instead of
        # the XLU so the kernel stays HBM-bound.
        ones = jnp.ones((x.shape[-1], 1), jnp.float32)
        dot = jnp.dot(xy, ones, preferred_element_type=jnp.float32)  # (TB, 1)
        sxx = jnp.dot(xx, ones, preferred_element_type=jnp.float32)  # (TB, 1)
        syy = jnp.dot(yy, ones, preferred_element_type=jnp.float32)  # (TB, 1)
    else:
        dot = jnp.sum(xy, axis=-1, keepdims=True)  # (TB, 1)
        sxx = jnp.sum(xx, axis=-1, keepdims=True)  # (TB, 1)
        syy = jnp.sum(yy, axis=-1, keepdims=True)  # (TB, 1)
    # 1 / max(||x|| * ||y||, eps) == min(rsqrt(sxx) * rsqrt(syy), 1/eps).
    # Two EUP rsqrts; no f32 overflow/underflow of the norm product.
    inv = jnp.minimum(lax.rsqrt(sxx) * lax.rsqrt(syy), 1.0 / _EPS)
    o_ref[...] = (1.0 - dot * inv).astype(o_ref.dtype)


def _row_alignment(dtype):
    """Sublane packing for the input dtype: 8 rows (f32), 16 (bf16), 32 (i8)."""
    itemsize = jnp.dtype(dtype).itemsize
    return max(8, 32 // itemsize)


def _vmem_capacity_bytes():
    """Physical VMEM bytes for this part, or None if the query is unavailable."""
    try:
        return int(pltpu.get_tpu_info().vmem_capacity_bytes)
    except Exception:
        return None


def _tile_and_vmem_config():
    """Return (target bytes per input tile, vmem_limit_bytes or None)."""
    phys = _vmem_capacity_bytes()
    if phys is None:
        # Unknown part: stay safely inside the default scoped-VMEM limit
        # (16 MiB on v5e): 2 inputs x 2 pipeline buffers x 2 MiB = 8 MiB.
        return 2 * _MIB, None
    if phys <= 32 * _MIB:
        # Very small VMEM (older parts): small tiles, default scoped limit.
        return 1 * _MIB, None
    if phys <= 96 * _MIB:
        # v7x-class: 64 MiB VMEM per TensorCore.  6 MiB/input tiles keep the
        # ~0.35 us per-grid-step overhead under ~10% at 3.2 TB/s; total
        # (2 inputs x 2 buffers x 6 MiB + f32 temps + out column) < 56 MiB.
        return 6 * _MIB, min(56 * _MIB, phys - 8 * _MIB)
    # v5e / v6e: 128 MiB physical VMEM; 4 MiB/input tiles, explicit budget.
    return 4 * _MIB, 64 * _MIB


def _choose_tile_rows(B, D, dtype, target_tile_bytes):
    """Rows per tile: ~target bytes per input tile, sublane-aligned, <= padded B."""
    align = _row_alignment(dtype)
    bytes_per_row = max(1, D) * jnp.dtype(dtype).itemsize
    tb = (target_tile_bytes // bytes_per_row) // align * align
    tb = max(align, tb)
    b_aligned = ((B + align - 1) // align) * align
    return int(min(tb, b_aligned))


@functools.partial(jax.jit, static_argnames=("reduction", "tile_rows"))
def cos_sim_loss(inputs, targets, reduction=False, tile_rows=None):
    """Pallas implementation of CosSimLoss.forward.

    inputs, targets: (B, D) arrays (feature dim = last axis, PyTorch dim=1).
    reduction=True  -> (B,) per-sample losses
    reduction=False -> scalar mean loss (module default)
    tile_rows: optional static override of the batch tile size (testing).
    """
    B, D = inputs.shape
    target_bytes, vmem_limit = _tile_and_vmem_config()
    align = _row_alignment(inputs.dtype)

    if tile_rows is None:
        tb = _choose_tile_rows(B, D, inputs.dtype, target_bytes)
    else:
        tb = int(max(align, ((int(tile_rows) + align - 1) // align) * align))
    num_tiles = int(pl.cdiv(B, tb))

    itemsize = jnp.dtype(inputs.dtype).itemsize
    cost = pl.CostEstimate(
        flops=6 * B * D,              # mul+add for dot/sxx/syy per element
        transcendentals=2 * B,        # two rsqrts per row
        bytes_accessed=2 * B * D * itemsize + 4 * B,
    )

    cp_kwargs = dict(dimension_semantics=("parallel",))
    if vmem_limit is not None:
        cp_kwargs["vmem_limit_bytes"] = int(vmem_limit)

    kernel = functools.partial(
        _cossim_rows_kernel, use_mxu=(D <= _MXU_REDUCE_MAX_D))

    # No padding of the inputs: the ragged last block reads undefined rows
    # past B (row-local garbage only) and their output writes are dropped
    # because out_shape is exactly (B, 1).
    losses = pl.pallas_call(
        kernel,
        out_shape=jax.ShapeDtypeStruct((B, 1), jnp.float32),
        grid=(num_tiles,),
        in_specs=[
            pl.BlockSpec((tb, D), lambda i: (i, 0)),
            pl.BlockSpec((tb, D), lambda i: (i, 0)),
        ],
        out_specs=pl.BlockSpec((tb, 1), lambda i: (i, 0)),
        compiler_params=pltpu.CompilerParams(**cp_kwargs),
        cost_estimate=cost,
    )(inputs, targets)

    losses = losses[:, 0]
    if reduction:
        return losses
    # Mean over B floats is negligible; keep it in plain JAX.
    return jnp.mean(losses)


def _ref_cos_sim_loss(inputs, targets, reduction=False):
    # Pure-JAX reference mirroring torch.nn.functional.cosine_similarity.
    dot = jnp.sum(inputs * targets, axis=1)
    nx = jnp.linalg.norm(inputs, axis=1)
    ny = jnp.linalg.norm(targets, axis=1)
    cos = dot / jnp.maximum(nx * ny, _EPS)
    if reduction:
        return 1.0 - cos
    return 1.0 - jnp.mean(cos)


if __name__ == "__main__":
    key = jax.random.PRNGKey(0)
    k1, k2, k3, k4 = jax.random.split(key, 4)

    # Small shapes consistent with the module: (batch, hidden) embeddings.
    B, D = 2, 32
    inputs = jax.random.normal(k1, (B, D), dtype=jnp.float32)
    targets = jax.random.normal(k2, (B, D), dtype=jnp.float32)

    # reduction=False (module default): scalar mean loss.
    loss = cos_sim_loss(inputs, targets, reduction=False)
    jax.block_until_ready(loss)
    ref = _ref_cos_sim_loss(inputs, targets, reduction=False)
    assert jnp.allclose(loss, ref, atol=1e-5, rtol=1e-5), (loss, ref)

    # reduction=True: per-sample losses.
    loss_vec = cos_sim_loss(inputs, targets, reduction=True)
    jax.block_until_ready(loss_vec)
    ref_vec = _ref_cos_sim_loss(inputs, targets, reduction=True)
    assert jnp.allclose(loss_vec, ref_vec, atol=1e-5, rtol=1e-5), (loss_vec, ref_vec)

    # Non-tile-multiple batch with a forced small tile: multi-step grid plus a
    # ragged last block (no input padding), XLU-reduction path (D > 256).
    B2, D2 = 37, 512
    x2 = jax.random.normal(k3, (B2, D2), dtype=jnp.float32)
    y2 = jax.random.normal(k4, (B2, D2), dtype=jnp.float32)
    out2 = cos_sim_loss(x2, y2, reduction=True, tile_rows=16)
    jax.block_until_ready(out2)
    ref2 = _ref_cos_sim_loss(x2, y2, reduction=True)
    assert jnp.allclose(out2, ref2, atol=1e-5, rtol=1e-5)

    out2m = cos_sim_loss(x2, y2, reduction=False)
    jax.block_until_ready(out2m)
    assert jnp.allclose(out2m, _ref_cos_sim_loss(x2, y2, reduction=False),
                        atol=1e-5, rtol=1e-5)

    # Zero-vector row exercises the eps clamp (loss == 1), MXU-reduction path.
    x3 = jnp.zeros((8, 32), jnp.float32).at[1:].set(
        jax.random.normal(k1, (7, 32), dtype=jnp.float32))
    y3 = jax.random.normal(k2, (8, 32), dtype=jnp.float32)
    out3 = cos_sim_loss(x3, y3, reduction=True)
    jax.block_until_ready(out3)
    ref3 = _ref_cos_sim_loss(x3, y3, reduction=True)
    assert jnp.allclose(out3, ref3, atol=1e-5, rtol=1e-5), (out3, ref3)

    print("KERNEL_OK")
</pallas_src>

<mosaic_0001>
module attributes {stable_mosaic.version = 11 : i64} {
  func.func @_cossim_rows_kernel(%arg0: i32, %arg1: memref<8x32xf32, #tpu.memory_space<vmem>>, %arg2: memref<8x32xf32, #tpu.memory_space<vmem>>, %arg3: memref<8x1xf32, #tpu.memory_space<vmem>>) attributes {dimension_semantics = [#tpu.dimension_semantics<parallel>], iteration_bounds = array<i64: 1>, scalar_prefetch = 0 : i64, scratch_operands = 0 : i64, tpu.core_type = #tpu.core_type<tc>, window_params = [{transform_indices = @transform_0, window_bounds = array<i64: 8, 32>}, {transform_indices = @transform_1, window_bounds = array<i64: 8, 32>}, {transform_indices = @transform_2, window_bounds = array<i64: 8, 1>}]} {
    %c0 = arith.constant 0 : index
    %c0_0 = arith.constant 0 : index
    %0 = vector.load %arg1[%c0, %c0_0] : memref<8x32xf32, #tpu.memory_space<vmem>>, vector<8x32xf32>
    %c0_1 = arith.constant 0 : index
    %c0_2 = arith.constant 0 : index
    %1 = vector.load %arg2[%c0_1, %c0_2] : memref<8x32xf32, #tpu.memory_space<vmem>>, vector<8x32xf32>
    %2 = arith.mulf %0, %1 : vector<8x32xf32>
    %3 = arith.mulf %0, %0 : vector<8x32xf32>
    %4 = arith.mulf %1, %1 : vector<8x32xf32>
    %cst = arith.constant 1.000000e+00 : f32
    %5 = vector.broadcast %cst : f32 to vector<32x1xf32>
    %cst_3 = arith.constant dense<0.000000e+00> : vector<8x1xf32>
    %6 = tpu.matmul %2, %5, %cst_3 {dimension_numbers = #tpu.dot_dimension_numbers<[1], [0], [0], [1], [0, 0, 1, 1], [], []>} : vector<8x32xf32>, vector<32x1xf32>, vector<8x1xf32> -> vector<8x1xf32>
    %cst_4 = arith.constant dense<0.000000e+00> : vector<8x1xf32>
    %7 = tpu.matmul %3, %5, %cst_4 {dimension_numbers = #tpu.dot_dimension_numbers<[1], [0], [0], [1], [0, 0, 1, 1], [], []>} : vector<8x32xf32>, vector<32x1xf32>, vector<8x1xf32> -> vector<8x1xf32>
    %cst_5 = arith.constant dense<0.000000e+00> : vector<8x1xf32>
    %8 = tpu.matmul %4, %5, %cst_5 {dimension_numbers = #tpu.dot_dimension_numbers<[1], [0], [0], [1], [0, 0, 1, 1], [], []>} : vector<8x32xf32>, vector<32x1xf32>, vector<8x1xf32> -> vector<8x1xf32>
    %9 = math.rsqrt %7 : vector<8x1xf32>
    %10 = math.rsqrt %8 : vector<8x1xf32>
    %11 = arith.mulf %9, %10 : vector<8x1xf32>
    %cst_6 = arith.constant 1.000000e+08 : f32
    %12 = vector.broadcast %cst_6 : f32 to vector<8x1xf32>
    %13 = arith.minimumf %11, %12 : vector<8x1xf32>
    %14 = arith.mulf %6, %13 : vector<8x1xf32>
    %cst_7 = arith.constant 1.000000e+00 : f32
    %15 = vector.broadcast %cst_7 : f32 to vector<8x1xf32>
    %16 = arith.subf %15, %14 : vector<8x1xf32>
    %c0_8 = arith.constant 0 : index
    %c0_9 = arith.constant 0 : index
    %17 = vector.load %arg3[%c0_8, %c0_9] : memref<8x1xf32, #tpu.memory_space<vmem>>, vector<8x1xf32>
    tpu.vector_store %arg3[%c0_8, %c0_9], %16 {strides = array<i32>} : memref<8x1xf32, #tpu.memory_space<vmem>>, vector<8x1xf32>,
    return
  }
  func.func @transform_0(%arg0: i32) -> (i32, i32) {
    %c0_i32 = arith.constant 0 : i32
    %c0_i32_0 = arith.constant 0 : i32
    return %arg0, %c0_i32 : i32, i32
  }
  func.func @transform_1(%arg0: i32) -> (i32, i32) {
    %c0_i32 = arith.constant 0 : i32
    %c0_i32_0 = arith.constant 0 : i32
    return %arg0, %c0_i32 : i32, i32
  }
  func.func @transform_2(%arg0: i32) -> (i32, i32) {
    %c0_i32 = arith.constant 0 : i32
    %c0_i32_0 = arith.constant 0 : i32
    return %arg0, %c0_i32 : i32, i32
  }
}

</mosaic_0001>

<llo_original>
// kernel: cos_sim_loss.1
$region0: #{cos_sim_loss.1}
  #allocation0 [shape = 'u32[]', space=smem, size = 0x4, offset = 0x4, fixed_abs, tag = 'smem constant byte address 0x4 - core index']
  #allocation1 [shape = 'u32[144,128]{1,0:T(1,128)}', space=vmem, size = 0x12000, scoped, tag = 'internal scratch']
  %s0 = inlined_call_operand.hbm [shape: f32[2,32], index: 0, kind: input, shape index: {}]
  %s1 = inlined_call_operand.vmem [shape: f32[2,32], index: 1, kind: input, shape index: {}]
  %s2 = inlined_call_operand.vmem [shape: f32[2,1], index: 2, kind: output, shape index: {}]
  %s3 = sld [smem:[#allocation0]]
  $region52: #{cos_sim_loss.1} parent=0
    _
  %s5 = ssub.s32 1, %s3
  %s6 = scalar_select 0, %s5, %s3
  $region1: #{cos_sim_loss.1} parent=0
    #allocation2 [shape = 'u8[4096]{0}', space=vmem, size = 0x1000, scoped, tag = 'input window, operand 0, single buffered']
    #allocation3 [shape = 's32[1]{0}', space=sflag, size = 0x4, scoped, tag = 'scoped memory for cos_sim_loss.1']
    #allocation4 [shape = 'u8[4096]{0}', space=vmem, size = 0x1000, scoped, tag = 'output window, operand 0, single buffered']
    %7 = vsyncpa [#allocation3], 0
    // Predicated region
    $region2: #{cos_sim_loss.1} parent=1 // pred_check
      _
    $region3: #{cos_sim_loss.1} parent=1 // pred_check_branch
      %9 = sbr.rel (0) target = $region5
    $region4: #{cos_sim_loss.1} parent=1 // pred_region
      %s11 = ssub.s32 128, 32
      %12 = vsyncadd [#allocation3], %s11
      %s13 = sshll.u32 [#allocation2], 4
      %s14 = int_to_ptr.vmem [resolvable:$true] %s13
      %19 = dma.hbm_to_vmem [thread:$0]  %s0, 32, %s14, [#allocation3], 32, 32, 2
    $region5: #{cos_sim_loss.1} parent=1 // pred_fallthru
      _
    // Predicated region
    $region6: #{cos_sim_loss.1} parent=1 // pred_check
      _
    $region7: #{cos_sim_loss.1} parent=1 // pred_check_branch
      %21 = sbr.rel (0) target = $region9
    $region8: #{cos_sim_loss.1} parent=1 // pred_region
      _
    $region9: #{cos_sim_loss.1} parent=1 // pred_fallthru
      _
    // Predicated region
    $region10: #{cos_sim_loss.1} parent=1 // pred_check
      _
    $region11: #{cos_sim_loss.1} parent=1 // pred_check_branch
      %23 = sbr.rel (0) target = $region13
    $region12: #{cos_sim_loss.1} parent=1 // pred_region
      %24 = dma.done [#allocation3], 128
    $region13: #{cos_sim_loss.1} parent=1 // pred_fallthru
      _
    %v25 = vld [vmem:[#allocation2] sm:$0xff]
    %v26 = vld [vmem:[%s1] sm:$0xff]
    %v27 = vmul.f32 %v25, %v26
    %v28 = vmul.f32 %v25, %v25
    %v29 = vmul.f32 %v26, %v26
    %vm30 = vcmask 261120
    %v32 = vsel %vm30, %v27, 0
    %34 = vmatprep.subr.mxu0 0.0
    %35 = vmatpush1.msra.mxu0 1.0
    %36 = vmatprep.subr.mxu0 0.0
    %37 = vmatpush1.msra.mxu0 1.0
    %38 = vmatprep.subr.mxu0 0.0
    %39 = vmatpush1.msra.mxu0 1.0
    %40 = vmatprep.subr.mxu0 0.0
    %41 = vmatpush1.msra.mxu0 1.0
    %42 = vmatprep.subr.mxu0 0.0
    %43 = vmatpush1.msra.mxu0 0.0
    %44 = vmatprep.subr.mxu0 0.0
    %45 = vmatpush1.msra.mxu0 0.0
    %46 = vmatprep.subr.mxu0 0.0
    %47 = vmatpush1.msra.mxu0 0.0
    %48 = vmatprep.subr.mxu0 0.0
    %49 = vmatpush1.msra.mxu0 0.0
    %50 = vmatprep.subr.mxu0 0.0
    %51 = vmatpush1.msra.mxu0 0.0
    %52 = vmatprep.subr.mxu0 0.0
    %53 = vmatpush1.msra.mxu0 0.0
    %54 = vmatprep.subr.mxu0 0.0
    %55 = vmatpush1.msra.mxu0 0.0
    %56 = vmatprep.subr.mxu0 0.0
    %57 = vmatpush1.msra.mxu0 0.0
    %58 = vmatprep.subr.mxu0 0.0
    %59 = vmatpush1.msra.mxu0 0.0
    %60 = vmatprep.subr.mxu0 0.0
    %61 = vmatpush1.msra.mxu0 0.0
    %62 = vmatprep.subr.mxu0 0.0
    %63 = vmatpush1.msra.mxu0 0.0
    %64 = vmatprep.subr.mxu0 0.0
    %65 = vmatpush1.msra.mxu0 0.0
    %66 = vmatprep.subr.mxu0 0.0
    %67 = vmatpush1.msra.mxu0 0.0
    %68 = vmatprep.subr.mxu0 0.0
    %69 = vmatpush1.msra.mxu0 0.0
    %70 = vmatprep.subr.mxu0 0.0
    %71 = vmatpush1.msra.mxu0 0.0
    %72 = vmatprep.subr.mxu0 0.0
    %73 = vmatpush1.msra.mxu0 0.0
    %74 = vmatprep.subr.mxu0 0.0
    %75 = vmatpush1.msra.mxu0 0.0
    %76 = vmatprep.subr.mxu0 0.0
    %77 = vmatpush1.msra.mxu0 0.0
    %78 = vmatprep.subr.mxu0 0.0
    %79 = vmatpush1.msra.mxu0 0.0
    %80 = vmatprep.subr.mxu0 0.0
    %81 = vmatpush1.msra.mxu0 0.0
    %82 = vmatprep.subr.mxu0 0.0
    %83 = vmatpush1.msra.mxu0 0.0
    %84 = vmatprep.subr.mxu0 0.0
    %85 = vmatpush1.msra.mxu0 0.0
    %86 = vmatprep.subr.mxu0 0.0
    %87 = vmatpush1.msra.mxu0 0.0
    %88 = vmatprep.subr.mxu0 0.0
    %89 = vmatpush1.msra.mxu0 0.0
    %90 = vmatprep.subr.mxu0 0.0
    %91 = vmatpush1.msra.mxu0 0.0
    %92 = vmatprep.subr.mxu0 0.0
    %93 = vmatpush1.msra.mxu0 0.0
    %94 = vmatprep.subr.mxu0 0.0
    %95 = vmatpush1.msra.mxu0 0.0
    %96 = vmatprep.subr.mxu0 0.0
    %97 = vmatpush1.msra.mxu0 0.0
    %98 = vmatprep.mubr.f32.mxu0 0.0
    %99 = vmatmul.mubr.f32.gmra.mrb[0].mxu0 %v32
    %v100 = vpop.f32.mrb[0].mxu0
    %v101 = vadd.f32 0.0, %v100
    %v102 = vpop.f32.mrb[0].mxu0
    %103 = vdwg.mxu0
    %v105 = vsel %vm30, %v28, 0
    %107 = vmatprep.subr.mxu0 0.0
    %108 = vmatpush1.msra.mxu0 1.0
    %109 = vmatprep.subr.mxu0 0.0
    %110 = vmatpush1.msra.mxu0 1.0
    %111 = vmatprep.subr.mxu0 0.0
    %112 = vmatpush1.msra.mxu0 1.0
    %113 = vmatprep.subr.mxu0 0.0
    %114 = vmatpush1.msra.mxu0 1.0
    %115 = vmatprep.subr.mxu0 0.0
    %116 = vmatpush1.msra.mxu0 0.0
    %117 = vmatprep.subr.mxu0 0.0
    %118 = vmatpush1.msra.mxu0 0.0
    %119 = vmatprep.subr.mxu0 0.0
    %120 = vmatpush1.msra.mxu0 0.0
    %121 = vmatprep.subr.mxu0 0.0
    %122 = vmatpush1.msra.mxu0 0.0
    %123 = vmatprep.subr.mxu0 0.0
    %124 = vmatpush1.msra.mxu0 0.0
    %125 = vmatprep.subr.mxu0 0.0
    %126 = vmatpush1.msra.mxu0 0.0
    %127 = vmatprep.subr.mxu0 0.0
    %128 = vmatpush1.msra.mxu0 0.0
    %129 = vmatprep.subr.mxu0 0.0
    %130 = vmatpush1.msra.mxu0 0.0
    %131 = vmatprep.subr.mxu0 0.0
    %132 = vmatpush1.msra.mxu0 0.0
    %133 = vmatprep.subr.mxu0 0.0
    %134 = vmatpush1.msra.mxu0 0.0
    %135 = vmatprep.subr.mxu0 0.0
    %136 = vmatpush1.msra.mxu0 0.0
    %137 = vmatprep.subr.mxu0 0.0
    %138 = vmatpush1.msra.mxu0 0.0
    %139 = vmatprep.subr.mxu0 0.0
    %140 = vmatpush1.msra.mxu0 0.0
    %141 = vmatprep.subr.mxu0 0.0
    %142 = vmatpush1.msra.mxu0 0.0
    %143 = vmatprep.subr.mxu0 0.0
    %144 = vmatpush1.msra.mxu0 0.0
    %145 = vmatprep.subr.mxu0 0.0
    %146 = vmatpush1.msra.mxu0 0.0
    %147 = vmatprep.subr.mxu0 0.0
    %148 = vmatpush1.msra.mxu0 0.0
    %149 = vmatprep.subr.mxu0 0.0
    %150 = vmatpush1.msra.mxu0 0.0
    %151 = vmatprep.subr.mxu0 0.0
    %152 = vmatpush1.msra.mxu0 0.0
    %153 = vmatprep.subr.mxu0 0.0
    %154 = vmatpush1.msra.mxu0 0.0
    %155 = vmatprep.subr.mxu0 0.0
    %156 = vmatpush1.msra.mxu0 0.0
    %157 = vmatprep.subr.mxu0 0.0
    %158 = vmatpush1.msra.mxu0 0.0
    %159 = vmatprep.subr.mxu0 0.0
    %160 = vmatpush1.msra.mxu0 0.0
    %161 = vmatprep.subr.mxu0 0.0
    %162 = vmatpush1.msra.mxu0 0.0
    %163 = vmatprep.subr.mxu0 0.0
    %164 = vmatpush1.msra.mxu0 0.0
    %165 = vmatprep.subr.mxu0 0.0
    %166 = vmatpush1.msra.mxu0 0.0
    %167 = vmatprep.subr.mxu0 0.0
    %168 = vmatpush1.msra.mxu0 0.0
    %169 = vmatprep.subr.mxu0 0.0
    %170 = vmatpush1.msra.mxu0 0.0
    %171 = vmatprep.mubr.f32.mxu0 0.0
    %172 = vmatmul.mubr.f32.gmra.mrb[0].mxu0 %v105
    %v173 = vpop.f32.mrb[0].mxu0
    %v174 = vadd.f32 0.0, %v173
    %v175 = vpop.f32.mrb[0].mxu0
    %176 = vdwg.mxu0
    %v178 = vsel %vm30, %v29, 0
    %180 = vmatprep.subr.mxu0 0.0
    %181 = vmatpush1.msra.mxu0 1.0
    %182 = vmatprep.subr.mxu0 0.0
    %183 = vmatpush1.msra.mxu0 1.0
    %184 = vmatprep.subr.mxu0 0.0
    %185 = vmatpush1.msra.mxu0 1.0
    %186 = vmatprep.subr.mxu0 0.0
    %187 = vmatpush1.msra.mxu0 1.0
    %188 = vmatprep.subr.mxu0 0.0
    %189 = vmatpush1.msra.mxu0 0.0
    %190 = vmatprep.subr.mxu0 0.0
    %191 = vmatpush1.msra.mxu0 0.0
    %192 = vmatprep.subr.mxu0 0.0
    %193 = vmatpush1.msra.mxu0 0.0
    %194 = vmatprep.subr.mxu0 0.0
    %195 = vmatpush1.msra.mxu0 0.0
    %196 = vmatprep.subr.mxu0 0.0
    %197 = vmatpush1.msra.mxu0 0.0
    %198 = vmatprep.subr.mxu0 0.0
    %199 = vmatpush1.msra.mxu0 0.0
    %200 = vmatprep.subr.mxu0 0.0
    %201 = vmatpush1.msra.mxu0 0.0
    %202 = vmatprep.subr.mxu0 0.0
    %203 = vmatpush1.msra.mxu0 0.0
    %204 = vmatprep.subr.mxu0 0.0
    %205 = vmatpush1.msra.mxu0 0.0
    %206 = vmatprep.subr.mxu0 0.0
    %207 = vmatpush1.msra.mxu0 0.0
    %208 = vmatprep.subr.mxu0 0.0
    %209 = vmatpush1.msra.mxu0 0.0
    %210 = vmatprep.subr.mxu0 0.0
    %211 = vmatpush1.msra.mxu0 0.0
    %212 = vmatprep.subr.mxu0 0.0
    %213 = vmatpush1.msra.mxu0 0.0
    %214 = vmatprep.subr.mxu0 0.0
    %215 = vmatpush1.msra.mxu0 0.0
    %216 = vmatprep.subr.mxu0 0.0
    %217 = vmatpush1.msra.mxu0 0.0
    %218 = vmatprep.subr.mxu0 0.0
    %219 = vmatpush1.msra.mxu0 0.0
    %220 = vmatprep.subr.mxu0 0.0
    %221 = vmatpush1.msra.mxu0 0.0
    %222 = vmatprep.subr.mxu0 0.0
    %223 = vmatpush1.msra.mxu0 0.0
    %224 = vmatprep.subr.mxu0 0.0
    %225 = vmatpush1.msra.mxu0 0.0
    %226 = vmatprep.subr.mxu0 0.0
    %227 = vmatpush1.msra.mxu0 0.0
    %228 = vmatprep.subr.mxu0 0.0
    %229 = vmatpush1.msra.mxu0 0.0
    %230 = vmatprep.subr.mxu0 0.0
    %231 = vmatpush1.msra.mxu0 0.0
    %232 = vmatprep.subr.mxu0 0.0
    %233 = vmatpush1.msra.mxu0 0.0
    %234 = vmatprep.subr.mxu0 0.0
    %235 = vmatpush1.msra.mxu0 0.0
    %236 = vmatprep.subr.mxu0 0.0
    %237 = vmatpush1.msra.mxu0 0.0
    %238 = vmatprep.subr.mxu0 0.0
    %239 = vmatpush1.msra.mxu0 0.0
    %240 = vmatprep.subr.mxu0 0.0
    %241 = vmatpush1.msra.mxu0 0.0
    %242 = vmatprep.subr.mxu0 0.0
    %243 = vmatpush1.msra.mxu0 0.0
    %244 = vmatprep.mubr.f32.mxu0 0.0
    %245 = vmatmul.mubr.f32.gmra.mrb[0].mxu0 %v178
    %v246 = vpop.f32.mrb[0].mxu0
    %v247 = vadd.f32 0.0, %v246
    %v248 = vpop.f32.mrb[0].mxu0
    %249 = vdwg.mxu0
    %v250 = vrsqrt.pop %v174
    %v251 = vrsqrt.pop %v247
    %v252 = vmul.f32 %v250, %v251
    %v253 = vmin.f32 %v252, 1e+08
    %v254 = vmul.f32 %v101, %v253
    %v255 = vsub.f32 1.0, %v254
    %vm256 = vcmask 7168
    %257 = vst.msk [vmem:[#allocation4] sm:$0xff] %vm256, %v255
    // Predicated region
    $region14: #{cos_sim_loss.1} parent=1 // pred_check
      _
    $region15: #{cos_sim_loss.1} parent=1 // pred_check_branch
      %259 = sbr.rel (0) target = $region17
    $region16: #{cos_sim_loss.1} parent=1 // pred_region
      // Predicated region
      $region18: #{cos_sim_loss.1} parent=16 // pred_check
        _
      $region19: #{cos_sim_loss.1} parent=16 // pred_check_branch
        %261 = sbr.rel (0) target = $region21
      $region20: #{cos_sim_loss.1} parent=16 // pred_region
        // Predicated region
        $region22: #{cos_sim_loss.1} parent=20 // pred_check
          _
        $region23: #{cos_sim_loss.1} parent=20 // pred_check_branch
          %263 = sbr.rel target = $region25
        $region24: #{cos_sim_loss.1} parent=20 // pred_region
          // Predicated region
          $region37: #{cos_sim_loss.1} parent=24 // pred_check
            _
          $region38: #{cos_sim_loss.1} parent=24 // pred_check_branch
            %278 = sbr.rel (0) target = $region40
          $region39: #{cos_sim_loss.1} parent=24 // pred_region
            loop: start=0, step=1, limit=1
            $region41: #{cos_sim_loss.1} parent=39 // loop_pre_header
              _
            $region42: #{cos_sim_loss.1} parent=39 // loop_header
              %s281 = sphi 0, %s285
              %p282 = scmp.ge.s32.totalorder %s281, 1
              %s286 = sphi [#allocation4], [#allocation4]
              %s287 = sphi %s2, %s2
            $region43: #{cos_sim_loss.1} parent=39 // loop_header_branch
              %284 = sbr.rel (%p282) target = $region47
            $region44: #{cos_sim_loss.1} parent=39 // loop_body
              %v288 = vld [vmem:[%s286] sm:$0x3]
              %289 = vst [vmem:[%s287] sm:$0x3] %v288
            $region45: #{cos_sim_loss.1} parent=39 // loop_footer
              %s285 = sadd.s32 1, %s281
            $region46: #{cos_sim_loss.1} parent=39 // loop_footer_branch
              %280 = sbr.rel target = $region42
            $region47: #{cos_sim_loss.1} parent=39 // loop_exit
              _
          $region40: #{cos_sim_loss.1} parent=24 // pred_fallthru
            _
        $region25: #{cos_sim_loss.1} parent=20 // pred_fallthru
          _
        // Predicated region
        $region26: #{cos_sim_loss.1} parent=20 // pred_check
          _
        $region27: #{cos_sim_loss.1} parent=20 // pred_check_branch
          %265 = sbr.rel (0) target = $region29
        $region28: #{cos_sim_loss.1} parent=20 // pred_region
          loop: start=0, step=1, limit=1
          $region30: #{cos_sim_loss.1} parent=28 // loop_pre_header
            _
          $region31: #{cos_sim_loss.1} parent=28 // loop_header
            %s268 = sphi 0, %s272
            %p269 = scmp.ge.s32.totalorder %s268, 1
            %s273 = sphi [#allocation4], [#allocation4]
            %s274 = sphi %s2, %s2
          $region32: #{cos_sim_loss.1} parent=28 // loop_header_branch
            %271 = sbr.rel (%p269) target = $region36
          $region33: #{cos_sim_loss.1} parent=28 // loop_body
            %v275 = vld [vmem:[%s273] sm:$0x3]
            %276 = vst [vmem:[%s274] sm:$0x3] %v275
          $region34: #{cos_sim_loss.1} parent=28 // loop_footer
            %s272 = sadd.s32 1, %s268
          $region35: #{cos_sim_loss.1} parent=28 // loop_footer_branch
            %267 = sbr.rel target = $region31
          $region36: #{cos_sim_loss.1} parent=28 // loop_exit
            _
        $region29: #{cos_sim_loss.1} parent=20 // pred_fallthru
          _
      $region21: #{cos_sim_loss.1} parent=16 // pred_fallthru
        _
      %290 = vnop
    $region17: #{cos_sim_loss.1} parent=1 // pred_fallthru
      _
    // Predicated region
    $region48: #{cos_sim_loss.1} parent=1 // pred_check
      _
    $region49: #{cos_sim_loss.1} parent=1 // pred_check_branch
      %292 = sbr.rel (0) target = $region51
    $region50: #{cos_sim_loss.1} parent=1 // pred_region
      _
    $region51: #{cos_sim_loss.1} parent=1 // pred_fallthru
      _
    %293 = vsyncpa [#allocation3], 1

</llo_original>
